<compile_context>
chip_gen: v5e
topology: v5e:2x2
jax: 0.10.0
libtpu: 0.0.40
codegen_flags: <defaults>
</compile_context>

<pallas_src>
import functools

import jax
import jax.numpy as jnp
from jax.experimental import pallas as pl
from jax.experimental.pallas import tpu as pltpu


def _upblock_kernel(x_ref, w_ref, b_ref, o_ref, *, batch_tile):
    """One grid step: batch_tile images, already pixel-shuffled input.

    x_ref : (batch_tile, C4, 4*H*W)     pixel-shuffled input, lane-dense
    w_ref : (out_ch, C4)                1x1 conv weight
    b_ref : (out_ch, 1)                 bias (lane-broadcast)
    o_ref : (batch_tile, out_ch, 4*H*W) output in final memory order
    """
    w = w_ref[...]                         # (out_ch, C4)
    bias = b_ref[...]                      # (out_ch, 1)

    if batch_tile == 1:
        x = x_ref[0]                       # (C4, N)
        y = jnp.dot(w, x, preferred_element_type=jnp.float32)
        y = jnp.maximum(y + bias, 0.0)     # bias + ReLU in f32 on the VPU
        o_ref[0] = y.astype(o_ref.dtype)
    else:
        x = x_ref[...]                     # (bt, C4, N)
        wb = jnp.broadcast_to(w, (batch_tile,) + w.shape)   # tiny, hoisted once
        # Single batched contraction (batch dim on both operands -> standard
        # batched dot_general, no post-transpose, no unrolled vreg pressure).
        y = jnp.einsum('tok,tkn->ton', wb, x,
                       preferred_element_type=jnp.float32)
        y = jnp.maximum(y + bias[None], 0.0)
        o_ref[...] = y.astype(o_ref.dtype)


def _pick_batch_tile(b, per_image_bytes, *, target_bytes=1 << 20,
                     vmem_budget=8 << 20):
    """Largest divisor of b moving <= ~1 MB/step, double-buffered under budget,
    and keeping the grid length >= 2 (v7x has 2 TensorCores)."""
    best = 1
    for bt in range(1, b + 1):
        if bt * per_image_bytes > target_bytes:
            break
        if 2 * bt * per_image_bytes > vmem_budget:
            break
        if b % bt:
            continue
        if b >= 2 and (b // bt) < 2:
            continue
        best = bt
    return best


def up_block(x, w_conv, bias, *, batch_tile=None):
    """UpBlock forward: PixelShuffle(2) -> 1x1 conv (bias) -> ReLU.

    x      : (B, C, H, W), C % 4 == 0
    w_conv : (out_ch, C // 4)   (squeezed 1x1 conv weight)
    bias   : (out_ch,)
    returns: (B, out_ch, 2H, 2W)
    """
    b, c, h, w = x.shape
    assert c % 4 == 0
    c4 = c // 4
    out_ch = w_conv.shape[0]
    n = 4 * h * w                           # final lane width (multiple of 128 here)

    # PixelShuffle(2) done on the INPUT side (pure layout plumbing, 4x smaller
    # than doing it on the output).  After this, the kernel's output is already
    # in the final (B, out_ch, 2H, 2W) row-major order.
    #   xs[b, k, 64a + 32i + 2col + j] = x[b, 4k + 2i + j, a, col]
    xs = (x.reshape(b, c4, 2, 2, h, w)
           .transpose(0, 1, 4, 2, 5, 3)     # (b, k, a, i, col, j)
           .reshape(b, c4, n))

    itemsize = jnp.dtype(x.dtype).itemsize
    per_image_bytes = (c4 + out_ch) * n * itemsize
    if batch_tile is None:
        batch_tile = _pick_batch_tile(b, per_image_bytes)
    assert b % batch_tile == 0

    bias2 = bias.reshape(out_ch, 1)

    # Explicit VMEM budget (Pallas double-buffers each block).
    in_block_bytes = batch_tile * c4 * n * itemsize
    out_block_bytes = batch_tile * out_ch * n * itemsize
    vmem_limit = int(max(16 << 20, 4 * (in_block_bytes + out_block_bytes)))

    kernel = functools.partial(_upblock_kernel, batch_tile=batch_tile)

    y = pl.pallas_call(
        kernel,
        out_shape=jax.ShapeDtypeStruct((b, out_ch, n), x.dtype),
        grid_spec=pltpu.PrefetchScalarGridSpec(
            num_scalar_prefetch=0,
            grid=(b // batch_tile,),
            in_specs=[
                pl.BlockSpec((batch_tile, c4, n), lambda i: (i, 0, 0)),
                pl.BlockSpec((out_ch, c4), lambda i: (0, 0)),   # VMEM, feeds MXU
                pl.BlockSpec((out_ch, 1), lambda i: (0, 0)),    # VMEM bias
            ],
            out_specs=pl.BlockSpec((batch_tile, out_ch, n),
                                   lambda i: (i, 0, 0)),
        ),
        compiler_params=pltpu.CompilerParams(
            dimension_semantics=("parallel",),   # batch steps are independent
            vmem_limit_bytes=vmem_limit,
        ),
    )(xs, w_conv, bias2)

    # Contiguous (free) reshape: lane index 64a+32i+2col+j == (2a+i)*2W+(2col+j).
    return y.reshape(b, out_ch, 2 * h, 2 * w)


def upblock_reference(x, w_conv, bias):
    """Pure-JAX reference with identical semantics (for verification)."""
    b, c, h, w = x.shape
    r = 2
    oc_in = c // (r * r)
    # torch.nn.PixelShuffle(2): out[b, o, 2a+i, 2col+j] = x[b, o*4+i*2+j, a, col]
    ps = x.reshape(b, oc_in, r, r, h, w).transpose(0, 1, 4, 2, 5, 3)
    ps = ps.reshape(b, oc_in, h * r, w * r)
    y = jnp.einsum('bchw,oc->bohw', ps, w_conv) + bias[None, :, None, None]
    return jnp.maximum(y, 0.0)


if __name__ == "__main__":
    b, c, h, w = 2, 8, 16, 16      # in_channels % 4 == 0 (module assert)
    out_ch = 8

    key = jax.random.PRNGKey(0)
    k1, k2, k3 = jax.random.split(key, 3)
    x = jax.random.normal(k1, (b, c, h, w), jnp.float32)
    w_conv = jax.random.normal(k2, (out_ch, c // 4), jnp.float32) * 0.3
    bias = jax.random.normal(k3, (out_ch,), jnp.float32) * 0.1

    out = up_block(x, w_conv, bias)
    out = jax.block_until_ready(out)

    ref = upblock_reference(x, w_conv, bias)
    assert out.shape == (b, out_ch, 2 * h, 2 * w)
    max_err = float(jnp.max(jnp.abs(out - ref)))
    assert jnp.allclose(out, ref, atol=1e-5, rtol=1e-5), f"max abs err {max_err}"
    print("KERNEL_OK")
</pallas_src>

<mosaic_0001>
module attributes {stable_mosaic.version = 11 : i64} {
  func.func @_upblock_kernel(%arg0: i32, %arg1: memref<1x2x1024xf32, #tpu.memory_space<vmem>>, %arg2: memref<8x2xf32, #tpu.memory_space<vmem>>, %arg3: memref<8x1xf32, #tpu.memory_space<vmem>>, %arg4: memref<1x8x1024xf32, #tpu.memory_space<vmem>>) attributes {dimension_semantics = [#tpu.dimension_semantics<parallel>], iteration_bounds = array<i64: 2>, scalar_prefetch = 0 : i64, scratch_operands = 0 : i64, tpu.core_type = #tpu.core_type<tc>, window_params = [{transform_indices = @transform_0, window_bounds = array<i64: 1, 2, 1024>}, {pipeline_mode = #tpu.pipeline_mode<synchronous>, transform_indices = @transform_1, window_bounds = array<i64: 8, 2>}, {pipeline_mode = #tpu.pipeline_mode<synchronous>, transform_indices = @transform_2, window_bounds = array<i64: 8, 1>}, {transform_indices = @transform_3, window_bounds = array<i64: 1, 8, 1024>}]} {
    %c0 = arith.constant 0 : index
    %c0_0 = arith.constant 0 : index
    %0 = vector.load %arg2[%c0, %c0_0] : memref<8x2xf32, #tpu.memory_space<vmem>>, vector<8x2xf32>
    %c0_1 = arith.constant 0 : index
    %c0_2 = arith.constant 0 : index
    %1 = vector.load %arg3[%c0_1, %c0_2] : memref<8x1xf32, #tpu.memory_space<vmem>>, vector<8x1xf32>
    %c0_3 = arith.constant 0 : index
    %c0_4 = arith.constant 0 : index
    %c0_5 = arith.constant 0 : index
    %2 = vector.load %arg1[%c0_3, %c0_4, %c0_5] : memref<1x2x1024xf32, #tpu.memory_space<vmem>>, vector<1x2x1024xf32>
    %3 = vector.shape_cast %2 : vector<1x2x1024xf32> to vector<2x1024xf32>
    %cst = arith.constant dense<0.000000e+00> : vector<8x1024xf32>
    %4 = tpu.matmul %0, %3, %cst {dimension_numbers = #tpu.dot_dimension_numbers<[1], [0], [0], [1], [0, 0, 1, 1], [], []>} : vector<8x2xf32>, vector<2x1024xf32>, vector<8x1024xf32> -> vector<8x1024xf32>
    %5 = vector.broadcast %1 : vector<8x1xf32> to vector<8x1024xf32>
    %6 = arith.addf %4, %5 : vector<8x1024xf32>
    %cst_6 = arith.constant 0.000000e+00 : f32
    %7 = vector.broadcast %cst_6 : f32 to vector<8x1024xf32>
    %8 = arith.maximumf %6, %7 : vector<8x1024xf32>
    %c0_7 = arith.constant 0 : index
    %c0_8 = arith.constant 0 : index
    %c0_9 = arith.constant 0 : index
    %9 = vector.load %arg4[%c0_7, %c0_8, %c0_9] : memref<1x8x1024xf32, #tpu.memory_space<vmem>>, vector<1x8x1024xf32>
    %10 = vector.shape_cast %9 : vector<1x8x1024xf32> to vector<8x1024xf32>
    %11 = vector.shape_cast %8 : vector<8x1024xf32> to vector<1x8x1024xf32>
    tpu.vector_store %arg4[%c0_7, %c0_8, %c0_9], %11 {strides = array<i32>} : memref<1x8x1024xf32, #tpu.memory_space<vmem>>, vector<1x8x1024xf32>,
    return
  }
  func.func @transform_0(%arg0: i32) -> (i32, i32, i32) {
    %c0_i32 = arith.constant 0 : i32
    %c0_i32_0 = arith.constant 0 : i32
    %c0_i32_1 = arith.constant 0 : i32
    return %arg0, %c0_i32, %c0_i32_0 : i32, i32, i32
  }
  func.func @transform_1(%arg0: i32) -> (i32, i32) {
    %c0_i32 = arith.constant 0 : i32
    %c0_i32_0 = arith.constant 0 : i32
    %c0_i32_1 = arith.constant 0 : i32
    return %c0_i32, %c0_i32_0 : i32, i32
  }
  func.func @transform_2(%arg0: i32) -> (i32, i32) {
    %c0_i32 = arith.constant 0 : i32
    %c0_i32_0 = arith.constant 0 : i32
    %c0_i32_1 = arith.constant 0 : i32
    return %c0_i32, %c0_i32_0 : i32, i32
  }
  func.func @transform_3(%arg0: i32) -> (i32, i32, i32) {
    %c0_i32 = arith.constant 0 : i32
    %c0_i32_0 = arith.constant 0 : i32
    %c0_i32_1 = arith.constant 0 : i32
    return %arg0, %c0_i32, %c0_i32_0 : i32, i32, i32
  }
}

</mosaic_0001>

<llo_original>
// kernel: tpu_custom_call.1
$region0: #{tpu_custom_call.1}
  #allocation0 [shape = 'u32[]', space=smem, size = 0x4, offset = 0x4, fixed_abs, tag = 'smem constant byte address 0x4 - core index']
  #allocation1 [shape = 'u32[72,128]{1,0:T(1,128)}', space=vmem, size = 0x9000, scoped, tag = 'internal scratch']
  %s0 = inlined_call_operand.hbm [shape: f32[2,2,1024], index: 0, kind: input, shape index: {}]
  %s1 = inlined_call_operand.vmem [shape: f32[8,2], index: 1, kind: input, shape index: {}]
  %s2 = inlined_call_operand.vmem [shape: f32[8,1], index: 2, kind: input, shape index: {}]
  %s3 = inlined_call_operand.hbm [shape: f32[2,8,1024], index: 3, kind: output, shape index: {}]
  %s4 = sld [smem:[#allocation0]]
  $region49: #{tpu_custom_call.1} parent=0
    _
  %s6 = ssub.s32 1, %s4
  %s7 = scalar_select 0, %s6, %s4
  $region1: #{tpu_custom_call.1} parent=0
    #allocation2 [shape = 'u8[16384]{0}', space=vmem, size = 0x4000, scoped, tag = 'input window, operand 0']
    #allocation3 [shape = 's32[2]{0}', space=sflag, size = 0x8, scoped, tag = 'scoped memory for tpu_custom_call.1']
    #allocation4 [shape = 's32[2]{0}', space=sflag, size = 0x8, scoped, tag = 'scoped memory for tpu_custom_call.1']
    #allocation5 [shape = 'u8[65536]{0}', space=vmem, size = 0x10000, scoped, tag = 'output window, operand 0']
    %8 = vsyncpa [#allocation3], 0
    %s9 = scalar_lea.sflag [#allocation3], 1
    %10 = vsyncpa %s9, 0
    %11 = vsyncpa [#allocation4], 0
    %s12 = scalar_lea.sflag [#allocation4], 1
    %13 = vsyncpa %s12, 0
    loop: start=0, step=1, limit=4
    $region2: #{tpu_custom_call.1} parent=1 // loop_pre_header
      _
    $region3: #{tpu_custom_call.1} parent=1 // loop_header
      %s15 = sphi 0, %s19
      %p16 = scmp.ge.s32.totalorder %s15, 4
      %s25 = sphi 0, %s27
      %s28 = sphi 0, %s25
      %s29 = sphi 0, %s28
      %s45 = sphi 0, %s29
      %s49 = sphi 0, %s49
      %s51 = sphi 0, %s49
      %s52 = sphi 0, %s51
      %s66 = sphi 0, %s52
      %s70 = sphi 0, %s70
      %s72 = sphi 0, %s70
      %s73 = sphi 0, %s72
      %s87 = sphi 0, %s73
      %s93 = sphi 0, %s95
      %s96 = sphi 0, %s93
      %s97 = sphi 0, %s96
      %s113 = sphi 0, %s97
    $region4: #{tpu_custom_call.1} parent=1 // loop_header_branch
      %18 = sbr.rel (%p16) target = $region8
    $region5: #{tpu_custom_call.1} parent=1 // loop_body
      %s20 = ssub.s32 %s15, 1
      %s21 = ssub.s32 %s15, 2
      %s22 = sadd.s32 %s15, 1
      %s23 = ssub.s32 %s15, %s22
      %p24 = scmp.eq.s32.totalorder %s23, 0
      %s26 = sadd.s32 %s25, 1
      %s27 = scalar_select %p24, %s25, %s26
      %p30 = pneg %p24
      %p31 = scmp.eq.s32.totalorder %s15, 1
      %p32 = por %p30, %p31
      %p33 = scmp.ne.s32.totalorder %s25, %s28
      %p34 = scmp.eq.s32.totalorder %s15, 0
      %p35 = por %p33, %p34
      %p36 = scmp.ne.s32.totalorder %s25, %s28
      %p37 = scmp.eq.s32.totalorder %s20, 1
      %p38 = por %p36, %p37
      %p39 = scmp.ne.s32.totalorder %s28, %s29
      %p40 = scmp.eq.s32.totalorder %s20, 0
      %p41 = por %p39, %p40
      %p42 = scmp.ne.s32.totalorder %s28, %s29
      %p43 = scmp.eq.s32.totalorder %s21, 1
      %p44 = por %p42, %p43
      %p46 = scmp.ne.s32.totalorder %s29, %s45
      %p47 = scmp.eq.s32.totalorder %s21, 0
      %p48 = por %p46, %p47
      %s50 = sadd.s32 %s49, 1
      %p53 = scmp.eq.s32.totalorder %s15, 1
      %p54 = scmp.ne.s32.totalorder %s49, %s51
      %p55 = scmp.eq.s32.totalorder %s15, 0
      %p56 = por %p54, %p55
      %p57 = scmp.ne.s32.totalorder %s49, %s51
      %p58 = scmp.eq.s32.totalorder %s20, 1
      %p59 = por %p57, %p58
      %p60 = scmp.ne.s32.totalorder %s51, %s52
      %p61 = scmp.eq.s32.totalorder %s20, 0
      %p62 = por %p60, %p61
      %p63 = scmp.ne.s32.totalorder %s51, %s52
      %p64 = scmp.eq.s32.totalorder %s21, 1
      %p65 = por %p63, %p64
      %p67 = scmp.ne.s32.totalorder %s52, %s66
      %p68 = scmp.eq.s32.totalorder %s21, 0
      %p69 = por %p67, %p68
      %s71 = sadd.s32 %s70, 1
      %p74 = scmp.eq.s32.totalorder %s15, 1
      %p75 = scmp.ne.s32.totalorder %s70, %s72
      %p76 = scmp.eq.s32.totalorder %s15, 0
      %p77 = por %p75, %p76
      %p78 = scmp.ne.s32.totalorder %s70, %s72
      %p79 = scmp.eq.s32.totalorder %s20, 1
      %p80 = por %p78, %p79
      %p81 = scmp.ne.s32.totalorder %s72, %s73
      %p82 = scmp.eq.s32.totalorder %s20, 0
      %p83 = por %p81, %p82
      %p84 = scmp.ne.s32.totalorder %s72, %s73
      %p85 = scmp.eq.s32.totalorder %s21, 1
      %p86 = por %p84, %p85
      %p88 = scmp.ne.s32.totalorder %s73, %s87
      %p89 = scmp.eq.s32.totalorder %s21, 0
      %p90 = por %p88, %p89
      %s91 = ssub.s32 %s15, %s22
      %p92 = scmp.eq.s32.totalorder %s91, 0
      %s94 = sadd.s32 %s93, 1
      %s95 = scalar_select %p92, %s93, %s94
      %p98 = pneg %p92
      %p99 = scmp.eq.s32.totalorder %s15, 1
      %p100 = por %p98, %p99
      %p101 = scmp.ne.s32.totalorder %s93, %s96
      %p102 = scmp.eq.s32.totalorder %s15, 0
      %p103 = por %p101, %p102
      %p104 = scmp.ne.s32.totalorder %s93, %s96
      %p105 = scmp.eq.s32.totalorder %s20, 1
      %p106 = por %p104, %p105
      %p107 = scmp.ne.s32.totalorder %s96, %s97
      %p108 = scmp.eq.s32.totalorder %s20, 0
      %p109 = por %p107, %p108
      %p110 = scmp.ne.s32.totalorder %s96, %s97
      %p111 = scmp.eq.s32.totalorder %s21, 1
      %p112 = por %p110, %p111
      %p114 = scmp.ne.s32.totalorder %s97, %s113
      %p115 = scmp.eq.s32.totalorder %s21, 0
      %p116 = por %p114, %p115
      %p117 = scmp.le.s32.totalorder 1, %s15
      %p118 = scmp.lt.s32.totalorder %s15, 3
      %p119 = pnand %p117, %p118
      %p120 = pneg %p119
      // Predicated region
      $region9: #{tpu_custom_call.1} parent=5 // pred_check
        _
      $region10: #{tpu_custom_call.1} parent=5 // pred_check_branch
        %122 = sbr.rel (%p119) target = $region12
      $region11: #{tpu_custom_call.1} parent=5 // pred_region
        %s123 = ssub.s32 %s15, 1
        // Predicated region
        $region13: #{tpu_custom_call.1} parent=11 // pred_check
          %p124 = pneg %p62
        $region14: #{tpu_custom_call.1} parent=11 // pred_check_branch
          %126 = sbr.rel (%p124) target = $region16
        $region15: #{tpu_custom_call.1} parent=11 // pred_region
          _
        $region16: #{tpu_custom_call.1} parent=11 // pred_fallthru
          _
        // Predicated region
        $region17: #{tpu_custom_call.1} parent=11 // pred_check
          %p127 = pneg %p83
        $region18: #{tpu_custom_call.1} parent=11 // pred_check_branch
          %129 = sbr.rel (%p127) target = $region20
        $region19: #{tpu_custom_call.1} parent=11 // pred_region
          _
        $region20: #{tpu_custom_call.1} parent=11 // pred_fallthru
          _
      $region12: #{tpu_custom_call.1} parent=5 // pred_fallthru
        _
      %p130 = scmp.lt.s32.totalorder %s15, 2
      // Predicated region
      $region21: #{tpu_custom_call.1} parent=5 // pred_check
        %p131 = pneg %p130
      $region22: #{tpu_custom_call.1} parent=5 // pred_check_branch
        %133 = sbr.rel (%p131) target = $region24
      $region23: #{tpu_custom_call.1} parent=5 // pred_region
        // Predicated region
        $region25: #{tpu_custom_call.1} parent=23 // pred_check
          %p134 = pneg %p35
        $region26: #{tpu_custom_call.1} parent=23 // pred_check_branch
          %136 = sbr.rel (%p134) target = $region28
        $region27: #{tpu_custom_call.1} parent=23 // pred_region
          %s137 = sand.u32 %s25, 1
          %s138 = scalar_lea.sflag [#allocation3], %s137
          %s139 = sand.u32 %s25, 1
          %s140 = smul.addr %s139, 16
          %s141 = scalar_lea.vmem [#allocation2], %s140
          %143 = vsyncadd %s138, 0
          %s144 = smul.addr %s15, 8
          %s145 = smul.addr %s144, 2
          %s146 = scalar_lea.hbm %s0, %s145
          %s148 = sshll.u32 %s146, 4
          %s149 = int_to_ptr.hbm [resolvable:$true] %s148
          %s150 = sshll.u32 %s141, 4
          %s151 = int_to_ptr.vmem [resolvable:$true] %s150
          %153 = dma.hbm_to_vmem [thread:$0]  %s149, 256, %s151, %s138
        $region28: #{tpu_custom_call.1} parent=23 // pred_fallthru
          _
      $region24: #{tpu_custom_call.1} parent=5 // pred_fallthru
        _
      %p154 = scmp.le.s32.totalorder 1, %s15
      %p155 = scmp.lt.s32.totalorder %s15, 3
      %p156 = pnand %p154, %p155
      %p157 = pneg %p156
      // Predicated region
      $region29: #{tpu_custom_call.1} parent=5 // pred_check
        _
      $region30: #{tpu_custom_call.1} parent=5 // pred_check_branch
        %159 = sbr.rel (%p156) target = $region32
      $region31: #{tpu_custom_call.1} parent=5 // pred_region
        %s160 = ssub.s32 %s15, 1
        %s161 = sand.u32 %s28, 1
        %s162 = scalar_lea.sflag [#allocation3], %s161
        %s163 = sand.u32 %s28, 1
        %s164 = smul.addr %s163, 16
        %s165 = scalar_lea.vmem [#allocation2], %s164
        // Predicated region
        $region33: #{tpu_custom_call.1} parent=31 // pred_check
          %p166 = pneg %p41
        $region34: #{tpu_custom_call.1} parent=31 // pred_check_branch
          %168 = sbr.rel (%p166) target = $region36
        $region35: #{tpu_custom_call.1} parent=31 // pred_region
          %170 = dma.done %s162, 256
        $region36: #{tpu_custom_call.1} parent=31 // pred_fallthru
          _
        %s171 = sand.u32 %s28, 1
        %s172 = scalar_lea.sflag [#allocation3], %s171
        %s173 = sand.u32 %s28, 1
        %s174 = smul.addr %s173, 16
        %s175 = scalar_lea.vmem [#allocation2], %s174
        %p176 = pneg %p41
        %p177 = pneg %p38
        %p178 = pneg %p62
        %p179 = pneg %p59
        %p180 = pneg %p83
        %p181 = pneg %p80
        %p182 = pneg %p109
        %p183 = pneg %p106
        %s184 = sand.u32 %s96, 1
        %s185 = scalar_lea.sflag [#allocation4], %s184
        %s186 = sand.u32 %s96, 1
        %s187 = smul.addr %s186, 64
        %s188 = scalar_lea.vmem [#allocation5], %s187
        %v189 = vld [vmem:[%s1] sm:$0xff]
        %v190 = vld [vmem:[%s2] sm:$0xff]
        %v191 = vld [vmem:[%s165] sm:$0xff]
        %v192 = vld [vmem:[%s165 + $0x8] sm:$0xff]
        %194 = vset.pattern.permute.xlu0 0
        %195 = vperm.xlu0 %194, %v190
        %v196 = vpop.permute.xlu0 %195
        %200 = vst [vmem:[#allocation1] ss:$4 sm:$0xff] %v191
        %s201 = scalar_lea.vmem [#allocation1], 32
        %202 = vst [vmem:[%s201] ss:$4 sm:$0xff] %v192
        %v203 = vld.sshfl [vmem:[#allocation1] sm:$0xff pattern:$0x73625140]
        %v204 = vld.sshfl [vmem:[#allocation1 + $0x8] sm:$0xff pattern:$0x73625140]
        %v205 = vld.sshfl [vmem:[#allocation1 + $0x10] sm:$0xff pattern:$0x73625140]
        %v206 = vld.sshfl [vmem:[#allocation1 + $0x18] sm:$0xff pattern:$0x73625140]
        %v207 = vld.sshfl [vmem:[#allocation1 + $0x20] sm:$0xff pattern:$0x73625140]
        %v208 = vld.sshfl [vmem:[#allocation1 + $0x28] sm:$0xff pattern:$0x73625140]
        %v209 = vld.sshfl [vmem:[#allocation1 + $0x30] sm:$0xff pattern:$0x73625140]
        %v210 = vld.sshfl [vmem:[#allocation1 + $0x38] sm:$0xff pattern:$0x73625140]
        %vm211 = vcmask 15360
        %v213 = vsel %vm211, %v189, 0
        %vm215 = vcmask 1041408
        %v216 = vsel %vm215, %v203, 0
        %v218 = vsel %vm215, %v204, 0
        %v220 = vsel %vm215, %v205, 0
        %v222 = vsel %vm215, %v206, 0
        %v224 = vsel %vm215, %v207, 0
        %v226 = vsel %vm215, %v208, 0
        %v228 = vsel %vm215, %v209, 0
        %v230 = vsel %vm215, %v210, 0
        %232 = vmatpush.msra.mxu0 0.0
        %233 = vmatpush.msra.mxu0 0.0
        %234 = vmatpush.msra.mxu0 0.0
        %235 = vmatpush.msra.mxu0 0.0
        %236 = vmatpush.msra.mxu0 0.0
        %237 = vmatpush.msra.mxu0 0.0
        %238 = vmatpush.msra.mxu0 0.0
        %239 = vmatpush.msra.mxu0 0.0
        %240 = vmatpush.msra.mxu0 0.0
        %241 = vmatpush.msra.mxu0 0.0
        %242 = vmatpush.msra.mxu0 0.0
        %243 = vmatpush.msra.mxu0 0.0
        %244 = vmatpush.msra.mxu0 0.0
        %245 = vmatpush.msra.mxu0 0.0
        %246 = vmatpush.msra.mxu0 0.0
        %247 = vmatpush.msra.mxu0 %v216
        %248 = vmatmul.f32.gmra.mxu0 %v213
        %v249 = vpop.f32.mrf.mxu0
        %v250 = vadd.f32 %v196, %v249
        %251 = vdwg.mxu0
        %252 = vmatpush.msra.mxu0 0.0
        %253 = vmatpush.msra.mxu0 0.0
        %254 = vmatpush.msra.mxu0 0.0
        %255 = vmatpush.msra.mxu0 0.0
        %256 = vmatpush.msra.mxu0 0.0
        %257 = vmatpush.msra.mxu0 0.0
        %258 = vmatpush.msra.mxu0 0.0
        %259 = vmatpush.msra.mxu0 0.0
        %260 = vmatpush.msra.mxu0 0.0
        %261 = vmatpush.msra.mxu0 0.0
        %262 = vmatpush.msra.mxu0 0.0
        %263 = vmatpush.msra.mxu0 0.0
        %264 = vmatpush.msra.mxu0 0.0
        %265 = vmatpush.msra.mxu0 0.0
        %266 = vmatpush.msra.mxu0 0.0
        %267 = vmatpush.msra.mxu0 %v218
        %268 = vmatmul.f32.gmra.mxu0 %v213
        %v269 = vpop.f32.mrf.mxu0
        %v270 = vadd.f32 %v196, %v269
        %271 = vdwg.mxu0
        %272 = vmatpush.msra.mxu0 0.0
        %273 = vmatpush.msra.mxu0 0.0
        %274 = vmatpush.msra.mxu0 0.0
        %275 = vmatpush.msra.mxu0 0.0
        %276 = vmatpush.msra.mxu0 0.0
        %277 = vmatpush.msra.mxu0 0.0
        %278 = vmatpush.msra.mxu0 0.0
        %279 = vmatpush.msra.mxu0 0.0
        %280 = vmatpush.msra.mxu0 0.0
        %281 = vmatpush.msra.mxu0 0.0
        %282 = vmatpush.msra.mxu0 0.0
        %283 = vmatpush.msra.mxu0 0.0
        %284 = vmatpush.msra.mxu0 0.0
        %285 = vmatpush.msra.mxu0 0.0
        %286 = vmatpush.msra.mxu0 0.0
        %287 = vmatpush.msra.mxu0 %v220
        %288 = vmatmul.f32.gmra.mxu0 %v213
        %v289 = vpop.f32.mrf.mxu0
        %v290 = vadd.f32 %v196, %v289
        %291 = vdwg.mxu0
        %292 = vmatpush.msra.mxu0 0.0
        %293 = vmatpush.msra.mxu0 0.0
        %294 = vmatpush.msra.mxu0 0.0
        %295 = vmatpush.msra.mxu0 0.0
        %296 = vmatpush.msra.mxu0 0.0
        %297 = vmatpush.msra.mxu0 0.0
        %298 = vmatpush.msra.mxu0 0.0
        %299 = vmatpush.msra.mxu0 0.0
        %300 = vmatpush.msra.mxu0 0.0
        %301 = vmatpush.msra.mxu0 0.0
        %302 = vmatpush.msra.mxu0 0.0
        %303 = vmatpush.msra.mxu0 0.0
        %304 = vmatpush.msra.mxu0 0.0
        %305 = vmatpush.msra.mxu0 0.0
        %306 = vmatpush.msra.mxu0 0.0
        %307 = vmatpush.msra.mxu0 %v222
        %308 = vmatmul.f32.gmra.mxu0 %v213
        %v309 = vpop.f32.mrf.mxu0
        %v310 = vadd.f32 %v196, %v309
        %311 = vdwg.mxu0
        %312 = vmatpush.msra.mxu0 0.0
        %313 = vmatpush.msra.mxu0 0.0
        %314 = vmatpush.msra.mxu0 0.0
        %315 = vmatpush.msra.mxu0 0.0
        %316 = vmatpush.msra.mxu0 0.0
        %317 = vmatpush.msra.mxu0 0.0
        %318 = vmatpush.msra.mxu0 0.0
        %319 = vmatpush.msra.mxu0 0.0
        %320 = vmatpush.msra.mxu0 0.0
        %321 = vmatpush.msra.mxu0 0.0
        %322 = vmatpush.msra.mxu0 0.0
        %323 = vmatpush.msra.mxu0 0.0
        %324 = vmatpush.msra.mxu0 0.0
        %325 = vmatpush.msra.mxu0 0.0
        %326 = vmatpush.msra.mxu0 0.0
        %327 = vmatpush.msra.mxu0 %v224
        %328 = vmatmul.f32.gmra.mxu0 %v213
        %v329 = vpop.f32.mrf.mxu0
        %v330 = vadd.f32 %v196, %v329
        %331 = vdwg.mxu0
        %332 = vmatpush.msra.mxu0 0.0
        %333 = vmatpush.msra.mxu0 0.0
        %334 = vmatpush.msra.mxu0 0.0
        %335 = vmatpush.msra.mxu0 0.0
        %336 = vmatpush.msra.mxu0 0.0
        %337 = vmatpush.msra.mxu0 0.0
        %338 = vmatpush.msra.mxu0 0.0
        %339 = vmatpush.msra.mxu0 0.0
        %340 = vmatpush.msra.mxu0 0.0
        %341 = vmatpush.msra.mxu0 0.0
        %342 = vmatpush.msra.mxu0 0.0
        %343 = vmatpush.msra.mxu0 0.0
        %344 = vmatpush.msra.mxu0 0.0
        %345 = vmatpush.msra.mxu0 0.0
        %346 = vmatpush.msra.mxu0 0.0
        %347 = vmatpush.msra.mxu0 %v226
        %348 = vmatmul.f32.gmra.mxu0 %v213
        %v349 = vpop.f32.mrf.mxu0
        %v350 = vadd.f32 %v196, %v349
        %351 = vdwg.mxu0
        %352 = vmatpush.msra.mxu0 0.0
        %353 = vmatpush.msra.mxu0 0.0
        %354 = vmatpush.msra.mxu0 0.0
        %355 = vmatpush.msra.mxu0 0.0
        %356 = vmatpush.msra.mxu0 0.0
        %357 = vmatpush.msra.mxu0 0.0
        %358 = vmatpush.msra.mxu0 0.0
        %359 = vmatpush.msra.mxu0 0.0
        %360 = vmatpush.msra.mxu0 0.0
        %361 = vmatpush.msra.mxu0 0.0
        %362 = vmatpush.msra.mxu0 0.0
        %363 = vmatpush.msra.mxu0 0.0
        %364 = vmatpush.msra.mxu0 0.0
        %365 = vmatpush.msra.mxu0 0.0
        %366 = vmatpush.msra.mxu0 0.0
        %367 = vmatpush.msra.mxu0 %v228
        %368 = vmatmul.f32.gmra.mxu0 %v213
        %v369 = vpop.f32.mrf.mxu0
        %v370 = vadd.f32 %v196, %v369
        %371 = vdwg.mxu0
        %372 = vmatpush.msra.mxu0 0.0
        %373 = vmatpush.msra.mxu0 0.0
        %374 = vmatpush.msra.mxu0 0.0
        %375 = vmatpush.msra.mxu0 0.0
        %376 = vmatpush.msra.mxu0 0.0
        %377 = vmatpush.msra.mxu0 0.0
        %378 = vmatpush.msra.mxu0 0.0
        %379 = vmatpush.msra.mxu0 0.0
        %380 = vmatpush.msra.mxu0 0.0
        %381 = vmatpush.msra.mxu0 0.0
        %382 = vmatpush.msra.mxu0 0.0
        %383 = vmatpush.msra.mxu0 0.0
        %384 = vmatpush.msra.mxu0 0.0
        %385 = vmatpush.msra.mxu0 0.0
        %386 = vmatpush.msra.mxu0 0.0
        %387 = vmatpush.msra.mxu0 %v230
        %388 = vmatmul.f32.gmra.mxu0 %v213
        %v389 = vpop.f32.mrf.mxu0
        %v390 = vadd.f32 %v196, %v389
        %391 = vdwg.mxu0
        %v392 = vmax.f32 %v250, 0.0
        %v393 = vmax.f32 %v270, 0.0
        %v394 = vmax.f32 %v290, 0.0
        %v395 = vmax.f32 %v310, 0.0
        %v396 = vmax.f32 %v330, 0.0
        %v397 = vmax.f32 %v350, 0.0
        %v398 = vmax.f32 %v370, 0.0
        %v399 = vmax.f32 %v390, 0.0
        %400 = vst [vmem:[%s188] sm:$0xff] %v392
        %401 = vst [vmem:[%s188 + $0x8] sm:$0xff] %v393
        %402 = vst [vmem:[%s188 + $0x10] sm:$0xff] %v394
        %403 = vst [vmem:[%s188 + $0x18] sm:$0xff] %v395
        %404 = vst [vmem:[%s188 + $0x20] sm:$0xff] %v396
        %405 = vst [vmem:[%s188 + $0x28] sm:$0xff] %v397
        %406 = vst [vmem:[%s188 + $0x30] sm:$0xff] %v398
        %407 = vst [vmem:[%s188 + $0x38] sm:$0xff] %v399
        %s408 = sand.u32 %s96, 1
        %s409 = scalar_lea.sflag [#allocation4], %s408
        %s410 = sand.u32 %s96, 1
        %s411 = smul.addr %s410, 64
        %s412 = scalar_lea.vmem [#allocation5], %s411
        // Predicated region
        $region37: #{tpu_custom_call.1} parent=31 // pred_check
          %p413 = pneg %p106
        $region38: #{tpu_custom_call.1} parent=31 // pred_check_branch
          %415 = sbr.rel (%p413) target = $region40
        $region39: #{tpu_custom_call.1} parent=31 // pred_region
          %417 = vsyncadd %s409, 0
          %s418 = smul.addr %s20, 8
          %s419 = smul.addr %s418, 8
          %s420 = scalar_lea.hbm %s3, %s419
          %s422 = sshll.u32 %s412, 4
          %s423 = int_to_ptr.vmem [resolvable:$true] %s422
          %s424 = sshll.u32 %s420, 4
          %s425 = int_to_ptr.hbm [resolvable:$true] %s424
          %427 = dma.vmem_to_hbm [thread:$0]  %s423, 1024, %s425, %s409
        $region40: #{tpu_custom_call.1} parent=31 // pred_fallthru
          _
      $region32: #{tpu_custom_call.1} parent=5 // pred_fallthru
        _
      %p428 = scmp.le.s32.totalorder 2, %s15
      // Predicated region
      $region41: #{tpu_custom_call.1} parent=5 // pred_check
        %p429 = pneg %p428
      $region42: #{tpu_custom_call.1} parent=5 // pred_check_branch
        %431 = sbr.rel (%p429) target = $region44
      $region43: #{tpu_custom_call.1} parent=5 // pred_region
        %s432 = ssub.s32 %s15, 2
        // Predicated region
        $region45: #{tpu_custom_call.1} parent=43 // pred_check
          %p433 = pneg %p112
        $region46: #{tpu_custom_call.1} parent=43 // pred_check_branch
          %435 = sbr.rel (%p433) target = $region48
        $region47: #{tpu_custom_call.1} parent=43 // pred_region
          %s436 = sand.u32 %s97, 1
          %s437 = scalar_lea.sflag [#allocation4], %s436
          %s438 = sand.u32 %s97, 1
          %s439 = smul.addr %s438, 64
          %s440 = scalar_lea.vmem [#allocation5], %s439
          %442 = dma.done %s437, 1024
        $region48: #{tpu_custom_call.1} parent=43 // pred_fallthru
          _
      $region44: #{tpu_custom_call.1} parent=5 // pred_fallthru
        _
    $region6: #{tpu_custom_call.1} parent=1 // loop_footer
      %s19 = sadd.s32 1, %s15
    $region7: #{tpu_custom_call.1} parent=1 // loop_footer_branch
      %14 = sbr.rel target = $region3
    $region8: #{tpu_custom_call.1} parent=1 // loop_exit
      _
    %443 = vsyncpa [#allocation3], 1
    %s444 = scalar_lea.sflag [#allocation3], 1
    %445 = vsyncpa %s444, 1
    %446 = vsyncpa [#allocation4], 1
    %s447 = scalar_lea.sflag [#allocation4], 1
    %448 = vsyncpa %s447, 1

</llo_original>
